<compile_context>
chip_gen: v7x
topology: tpu7x:2x2x1
jax: 0.10.0
libtpu: 0.0.40
codegen_flags: <defaults>
</compile_context>

<pallas_src>
import jax
import jax.numpy as jnp
from jax.experimental import pallas as pl
from jax.experimental.pallas import tpu as pltpu


LANE = 128   # lane width (last dim alignment)
SUB = 8      # sublane count (second-to-last dim alignment, f32)


def _round_up(x, m):
    return ((x + m - 1) // m) * m


def fused_rnn_kernel(x_ref, wih_ref, whh_ref, bias_ref, wlin_ref, blin_ref,
                     out_ref, hn_ref, hs_ref):
    """Single-invocation fused kernel.

    x_ref   : (T*Bp, Dp)  padded, time-major-flattened embedded tokens
    wih_ref : (Dp, Hp)    W_ih^T (zero padded)
    whh_ref : (Hp, Hp)    W_hh^T (zero padded)
    bias_ref: (1, Hp)     b_ih + b_hh (zero padded)
    wlin_ref: (Hp, Op)    W_lin^T (zero padded)
    blin_ref: (1, Op)     b_lin (zero padded)
    out_ref : (T*Bp, Op)  linear(rnn_out), lane-dense
    hn_ref  : (Bp, Hp)    final hidden state
    hs_ref  : (T*Bp, Hp)  VMEM scratch: holds x_proj, overwritten with h_t
    """
    Bp, Hp = hn_ref.shape
    T = x_ref.shape[0] // Bp

    # (1) Hoisted input projection: one big MXU GEMM, bias folded in.
    hs_ref[...] = (jnp.dot(x_ref[...], wih_ref[...],
                           preferred_element_type=jnp.float32)
                   + bias_ref[...])

    # (2) Serial recurrence: only a (Bp, Hp)x(Hp, Hp) matmul + tanh per step.
    whh = whh_ref[...]

    def step(t, h):
        row = pl.multiple_of(t * Bp, Bp)
        pre = hs_ref[pl.ds(row, Bp), :] + jnp.dot(
            h, whh, preferred_element_type=jnp.float32)
        h_new = jnp.tanh(pre)
        hs_ref[pl.ds(row, Bp), :] = h_new      # overwrite x_proj slot with h_t
        return h_new

    h0 = jnp.zeros((Bp, Hp), jnp.float32)
    h_last = jax.lax.fori_loop(0, T, step, h0, unroll=(T <= 16))
    hn_ref[...] = h_last

    # Dropout is identity in eval mode.
    # TODO(synk): training-mode dropout (random mask) intentionally omitted.

    # (3) Hoisted output Linear: one big (T*Bp, Hp)x(Hp, Op) GEMM.
    out_ref[...] = (jnp.dot(hs_ref[...], wlin_ref[...],
                            preferred_element_type=jnp.float32)
                    + blin_ref[...]).astype(out_ref.dtype)


def phrase2vec_rnn_forward(token_ids, embed_table, params):
    """token_ids: int32[T, B]; returns (out f32[T, B, O], h_n f32[1, B, H])."""
    T, B = token_ids.shape
    D = embed_table.shape[1]
    H = params["w_hh"].shape[0]
    O = params["w_lin"].shape[0]

    Bp = _round_up(max(B, SUB), SUB)
    Dp = _round_up(D, LANE)
    Hp = _round_up(H, LANE)
    Op = _round_up(O, LANE)

    # Frozen embedding lookup (glue), then pad batch/feature and flatten
    # time into the row dimension for the hoisted GEMMs.
    embed = jnp.take(embed_table, token_ids, axis=0)              # (T, B, D)
    embed = jnp.pad(embed, ((0, 0), (0, Bp - B), (0, Dp - D)))    # (T, Bp, Dp)
    x2d = embed.reshape(T * Bp, Dp)                               # (T*Bp, Dp)

    # Pre-transpose + zero-pad weights; combine the two RNN biases.
    wih_t = jnp.pad(params["w_ih"].T, ((0, Dp - D), (0, Hp - H)))    # (Dp, Hp)
    whh_t = jnp.pad(params["w_hh"].T, ((0, Hp - H), (0, Hp - H)))    # (Hp, Hp)
    bias = jnp.pad((params["b_ih"] + params["b_hh"]).reshape(1, H),
                   ((0, 0), (0, Hp - H)))                            # (1, Hp)
    wlin_t = jnp.pad(params["w_lin"].T, ((0, Hp - H), (0, Op - O)))  # (Hp, Op)
    blin = jnp.pad(params["b_lin"].reshape(1, O),
                   ((0, 0), (0, Op - O)))                            # (1, Op)

    grid_spec = pltpu.PrefetchScalarGridSpec(
        num_scalar_prefetch=0,
        grid=(1,),                                     # whole problem in one step
        in_specs=[
            pl.BlockSpec((T * Bp, Dp), lambda i: (0, 0)),   # x (flattened)
            pl.BlockSpec((Dp, Hp), lambda i: (0, 0)),       # W_ih^T
            pl.BlockSpec((Hp, Hp), lambda i: (0, 0)),       # W_hh^T
            pl.BlockSpec((1, Hp), lambda i: (0, 0)),        # b_ih + b_hh
            pl.BlockSpec((Hp, Op), lambda i: (0, 0)),       # W_lin^T
            pl.BlockSpec((1, Op), lambda i: (0, 0)),        # b_lin
        ],
        out_specs=[
            pl.BlockSpec((T * Bp, Op), lambda i: (0, 0)),   # out (lane-dense)
            pl.BlockSpec((Bp, Hp), lambda i: (0, 0)),       # h_n
        ],
        scratch_shapes=[pltpu.VMEM((T * Bp, Hp), jnp.float32)],  # x_proj / h_t
    )

    out2d, hn_p = pl.pallas_call(
        fused_rnn_kernel,
        out_shape=(
            jax.ShapeDtypeStruct((T * Bp, Op), jnp.float32),
            jax.ShapeDtypeStruct((Bp, Hp), jnp.float32),
        ),
        grid_spec=grid_spec,
        compiler_params=pltpu.CompilerParams(
            dimension_semantics=("arbitrary",),
        ),
    )(x2d, wih_t, whh_t, bias, wlin_t, blin)

    out = out2d.reshape(T, Bp, Op)[:, :B, :O]     # strip padding
    h_n = hn_p[None, :B, :H]                      # (1, B, H)
    return out, h_n


def reference_forward(token_ids, embed_table, params):
    """Pure-JAX reference (lax.scan) for correctness checking."""
    embed = jnp.take(embed_table, token_ids, axis=0)           # (T, B, D)
    H = params["w_hh"].shape[0]
    B = token_ids.shape[1]

    def step(h, x_t):
        h_new = jnp.tanh(x_t @ params["w_ih"].T + params["b_ih"]
                         + h @ params["w_hh"].T + params["b_hh"])
        y_t = h_new @ params["w_lin"].T + params["b_lin"]
        return h_new, y_t

    h0 = jnp.zeros((B, H), jnp.float32)
    h_last, ys = jax.lax.scan(step, h0, embed)
    return ys, h_last[None]


if __name__ == "__main__":
    # Small synthetic shapes (scaled down from dim=300, hidden=300).
    VOCAB = 50 + 2      # vocab + <OOV> + <PAD>
    D = 16              # embedding dim ("dim")
    H = 32              # RNN hidden size (stand-in for 300)
    O = 32              # linear output dim (stand-in for 300)
    T, B = 8, 2         # seq_len, batch

    key = jax.random.PRNGKey(0)
    k_emb, k_wih, k_whh, k_bih, k_bhh, k_wl, k_bl, k_tok = jax.random.split(key, 8)

    embed_table = jax.random.normal(k_emb, (VOCAB, D), jnp.float32) * 0.1
    params = {
        "w_ih": jax.random.normal(k_wih, (H, D), jnp.float32) * 0.1,
        "w_hh": jax.random.normal(k_whh, (H, H), jnp.float32) * 0.1,
        "b_ih": jax.random.normal(k_bih, (H,), jnp.float32) * 0.1,
        "b_hh": jax.random.normal(k_bhh, (H,), jnp.float32) * 0.1,
        "w_lin": jax.random.normal(k_wl, (O, H), jnp.float32) * 0.1,
        "b_lin": jax.random.normal(k_bl, (O,), jnp.float32) * 0.1,
    }
    token_ids = jax.random.randint(k_tok, (T, B), 0, VOCAB, dtype=jnp.int32)

    out, h_n = phrase2vec_rnn_forward(token_ids, embed_table, params)
    out = jax.block_until_ready(out)
    h_n = jax.block_until_ready(h_n)

    ref_out, ref_hn = reference_forward(token_ids, embed_table, params)
    assert out.shape == (T, B, O) and h_n.shape == (1, B, H)
    assert jnp.allclose(out, ref_out, atol=1e-5, rtol=1e-5)
    assert jnp.allclose(h_n, ref_hn, atol=1e-5, rtol=1e-5)

    print("KERNEL_OK")
</pallas_src>

<mosaic_0001>
module attributes {stable_mosaic.version = 11 : i64} {
  func.func @fused_rnn_kernel(%arg0: i32, %arg1: memref<64x128xf32, #tpu.memory_space<vmem>>, %arg2: memref<128x128xf32, #tpu.memory_space<vmem>>, %arg3: memref<128x128xf32, #tpu.memory_space<vmem>>, %arg4: memref<1x128xf32, #tpu.memory_space<vmem>>, %arg5: memref<128x128xf32, #tpu.memory_space<vmem>>, %arg6: memref<1x128xf32, #tpu.memory_space<vmem>>, %arg7: memref<64x128xf32, #tpu.memory_space<vmem>>, %arg8: memref<8x128xf32, #tpu.memory_space<vmem>>, %arg9: memref<64x128xf32, #tpu.memory_space<vmem>>) attributes {dimension_semantics = [#tpu.dimension_semantics<arbitrary>], iteration_bounds = array<i64: 1>, scalar_prefetch = 0 : i64, scratch_operands = 1 : i64, tpu.core_type = #tpu.core_type<tc>, window_params = [{pipeline_mode = #tpu.pipeline_mode<synchronous>, transform_indices = @transform_0, window_bounds = array<i64: 64, 128>}, {pipeline_mode = #tpu.pipeline_mode<synchronous>, transform_indices = @transform_1, window_bounds = array<i64: 128, 128>}, {pipeline_mode = #tpu.pipeline_mode<synchronous>, transform_indices = @transform_2, window_bounds = array<i64: 128, 128>}, {pipeline_mode = #tpu.pipeline_mode<synchronous>, transform_indices = @transform_3, window_bounds = array<i64: 1, 128>}, {pipeline_mode = #tpu.pipeline_mode<synchronous>, transform_indices = @transform_4, window_bounds = array<i64: 128, 128>}, {pipeline_mode = #tpu.pipeline_mode<synchronous>, transform_indices = @transform_5, window_bounds = array<i64: 1, 128>}, {pipeline_mode = #tpu.pipeline_mode<synchronous>, transform_indices = @transform_6, window_bounds = array<i64: 64, 128>}, {pipeline_mode = #tpu.pipeline_mode<synchronous>, transform_indices = @transform_7, window_bounds = array<i64: 8, 128>}]} {
    %c0 = arith.constant 0 : index
    %c0_0 = arith.constant 0 : index
    %0 = vector.load %arg1[%c0, %c0_0] : memref<64x128xf32, #tpu.memory_space<vmem>>, vector<64x128xf32>
    %c0_1 = arith.constant 0 : index
    %c0_2 = arith.constant 0 : index
    %1 = vector.load %arg2[%c0_1, %c0_2] : memref<128x128xf32, #tpu.memory_space<vmem>>, vector<128x128xf32>
    %cst = arith.constant dense<0.000000e+00> : vector<64x128xf32>
    %2 = tpu.matmul %0, %1, %cst {dimension_numbers = #tpu.dot_dimension_numbers<[1], [0], [0], [1], [0, 0, 1, 1], [], []>} : vector<64x128xf32>, vector<128x128xf32>, vector<64x128xf32> -> vector<64x128xf32>
    %c0_3 = arith.constant 0 : index
    %c0_4 = arith.constant 0 : index
    %3 = vector.load %arg4[%c0_3, %c0_4] : memref<1x128xf32, #tpu.memory_space<vmem>>, vector<1x128xf32>
    %4 = vector.broadcast %3 : vector<1x128xf32> to vector<64x128xf32>
    %5 = arith.addf %2, %4 : vector<64x128xf32>
    %c0_5 = arith.constant 0 : index
    %c0_6 = arith.constant 0 : index
    %6 = vector.load %arg9[%c0_5, %c0_6] : memref<64x128xf32, #tpu.memory_space<vmem>>, vector<64x128xf32>
    tpu.vector_store %arg9[%c0_5, %c0_6], %5 {strides = array<i32>} : memref<64x128xf32, #tpu.memory_space<vmem>>, vector<64x128xf32>,
    %c0_7 = arith.constant 0 : index
    %c0_8 = arith.constant 0 : index
    %7 = vector.load %arg3[%c0_7, %c0_8] : memref<128x128xf32, #tpu.memory_space<vmem>>, vector<128x128xf32>
    %cst_9 = arith.constant 0.000000e+00 : f32
    %8 = vector.broadcast %cst_9 : f32 to vector<8x128xf32>
    %c0_i32 = arith.constant 0 : i32
    %c8_i32 = arith.constant 8 : i32
    %9 = arith.muli %c0_i32, %c8_i32 : i32
    %10 = tpu.assume_multiple %9, 8 : i32
    %11 = arith.index_cast %10 : i32 to index
    %c0_10 = arith.constant 0 : index
    %12 = vector.load %arg9[%11, %c0_10] : memref<64x128xf32, #tpu.memory_space<vmem>>, vector<8x128xf32>
    %cst_11 = arith.constant dense<0.000000e+00> : vector<8x128xf32>
    %13 = tpu.matmul %8, %7, %cst_11 {dimension_numbers = #tpu.dot_dimension_numbers<[1], [0], [0], [1], [0, 0, 1, 1], [], []>} : vector<8x128xf32>, vector<128x128xf32>, vector<8x128xf32> -> vector<8x128xf32>
    %14 = arith.addf %12, %13 : vector<8x128xf32>
    %15 = math.tanh %14 : vector<8x128xf32>
    %16 = arith.index_cast %10 : i32 to index
    %c0_12 = arith.constant 0 : index
    %17 = vector.load %arg9[%16, %c0_12] : memref<64x128xf32, #tpu.memory_space<vmem>>, vector<8x128xf32>
    tpu.vector_store %arg9[%16, %c0_12], %15 {strides = array<i32>} : memref<64x128xf32, #tpu.memory_space<vmem>>, vector<8x128xf32>,
    %c1_i32 = arith.constant 1 : i32
    %c8_i32_13 = arith.constant 8 : i32
    %18 = arith.muli %c1_i32, %c8_i32_13 : i32
    %19 = tpu.assume_multiple %18, 8 : i32
    %20 = arith.index_cast %19 : i32 to index
    %c0_14 = arith.constant 0 : index
    %21 = vector.load %arg9[%20, %c0_14] : memref<64x128xf32, #tpu.memory_space<vmem>>, vector<8x128xf32>
    %cst_15 = arith.constant dense<0.000000e+00> : vector<8x128xf32>
    %22 = tpu.matmul %15, %7, %cst_15 {dimension_numbers = #tpu.dot_dimension_numbers<[1], [0], [0], [1], [0, 0, 1, 1], [], []>} : vector<8x128xf32>, vector<128x128xf32>, vector<8x128xf32> -> vector<8x128xf32>
    %23 = arith.addf %21, %22 : vector<8x128xf32>
    %24 = math.tanh %23 : vector<8x128xf32>
    %25 = arith.index_cast %19 : i32 to index
    %c0_16 = arith.constant 0 : index
    %26 = vector.load %arg9[%25, %c0_16] : memref<64x128xf32, #tpu.memory_space<vmem>>, vector<8x128xf32>
    tpu.vector_store %arg9[%25, %c0_16], %24 {strides = array<i32>} : memref<64x128xf32, #tpu.memory_space<vmem>>, vector<8x128xf32>,
    %c2_i32 = arith.constant 2 : i32
    %c8_i32_17 = arith.constant 8 : i32
    %27 = arith.muli %c2_i32, %c8_i32_17 : i32
    %28 = tpu.assume_multiple %27, 8 : i32
    %29 = arith.index_cast %28 : i32 to index
    %c0_18 = arith.constant 0 : index
    %30 = vector.load %arg9[%29, %c0_18] : memref<64x128xf32, #tpu.memory_space<vmem>>, vector<8x128xf32>
    %cst_19 = arith.constant dense<0.000000e+00> : vector<8x128xf32>
    %31 = tpu.matmul %24, %7, %cst_19 {dimension_numbers = #tpu.dot_dimension_numbers<[1], [0], [0], [1], [0, 0, 1, 1], [], []>} : vector<8x128xf32>, vector<128x128xf32>, vector<8x128xf32> -> vector<8x128xf32>
    %32 = arith.addf %30, %31 : vector<8x128xf32>
    %33 = math.tanh %32 : vector<8x128xf32>
    %34 = arith.index_cast %28 : i32 to index
    %c0_20 = arith.constant 0 : index
    %35 = vector.load %arg9[%34, %c0_20] : memref<64x128xf32, #tpu.memory_space<vmem>>, vector<8x128xf32>
    tpu.vector_store %arg9[%34, %c0_20], %33 {strides = array<i32>} : memref<64x128xf32, #tpu.memory_space<vmem>>, vector<8x128xf32>,
    %c3_i32 = arith.constant 3 : i32
    %c8_i32_21 = arith.constant 8 : i32
    %36 = arith.muli %c3_i32, %c8_i32_21 : i32
    %37 = tpu.assume_multiple %36, 8 : i32
    %38 = arith.index_cast %37 : i32 to index
    %c0_22 = arith.constant 0 : index
    %39 = vector.load %arg9[%38, %c0_22] : memref<64x128xf32, #tpu.memory_space<vmem>>, vector<8x128xf32>
    %cst_23 = arith.constant dense<0.000000e+00> : vector<8x128xf32>
    %40 = tpu.matmul %33, %7, %cst_23 {dimension_numbers = #tpu.dot_dimension_numbers<[1], [0], [0], [1], [0, 0, 1, 1], [], []>} : vector<8x128xf32>, vector<128x128xf32>, vector<8x128xf32> -> vector<8x128xf32>
    %41 = arith.addf %39, %40 : vector<8x128xf32>
    %42 = math.tanh %41 : vector<8x128xf32>
    %43 = arith.index_cast %37 : i32 to index
    %c0_24 = arith.constant 0 : index
    %44 = vector.load %arg9[%43, %c0_24] : memref<64x128xf32, #tpu.memory_space<vmem>>, vector<8x128xf32>
    tpu.vector_store %arg9[%43, %c0_24], %42 {strides = array<i32>} : memref<64x128xf32, #tpu.memory_space<vmem>>, vector<8x128xf32>,
    %c4_i32 = arith.constant 4 : i32
    %c8_i32_25 = arith.constant 8 : i32
    %45 = arith.muli %c4_i32, %c8_i32_25 : i32
    %46 = tpu.assume_multiple %45, 8 : i32
    %47 = arith.index_cast %46 : i32 to index
    %c0_26 = arith.constant 0 : index
    %48 = vector.load %arg9[%47, %c0_26] : memref<64x128xf32, #tpu.memory_space<vmem>>, vector<8x128xf32>
    %cst_27 = arith.constant dense<0.000000e+00> : vector<8x128xf32>
    %49 = tpu.matmul %42, %7, %cst_27 {dimension_numbers = #tpu.dot_dimension_numbers<[1], [0], [0], [1], [0, 0, 1, 1], [], []>} : vector<8x128xf32>, vector<128x128xf32>, vector<8x128xf32> -> vector<8x128xf32>
    %50 = arith.addf %48, %49 : vector<8x128xf32>
    %51 = math.tanh %50 : vector<8x128xf32>
    %52 = arith.index_cast %46 : i32 to index
    %c0_28 = arith.constant 0 : index
    %53 = vector.load %arg9[%52, %c0_28] : memref<64x128xf32, #tpu.memory_space<vmem>>, vector<8x128xf32>
    tpu.vector_store %arg9[%52, %c0_28], %51 {strides = array<i32>} : memref<64x128xf32, #tpu.memory_space<vmem>>, vector<8x128xf32>,
    %c5_i32 = arith.constant 5 : i32
    %c8_i32_29 = arith.constant 8 : i32
    %54 = arith.muli %c5_i32, %c8_i32_29 : i32
    %55 = tpu.assume_multiple %54, 8 : i32
    %56 = arith.index_cast %55 : i32 to index
    %c0_30 = arith.constant 0 : index
    %57 = vector.load %arg9[%56, %c0_30] : memref<64x128xf32, #tpu.memory_space<vmem>>, vector<8x128xf32>
    %cst_31 = arith.constant dense<0.000000e+00> : vector<8x128xf32>
    %58 = tpu.matmul %51, %7, %cst_31 {dimension_numbers = #tpu.dot_dimension_numbers<[1], [0], [0], [1], [0, 0, 1, 1], [], []>} : vector<8x128xf32>, vector<128x128xf32>, vector<8x128xf32> -> vector<8x128xf32>
    %59 = arith.addf %57, %58 : vector<8x128xf32>
    %60 = math.tanh %59 : vector<8x128xf32>
    %61 = arith.index_cast %55 : i32 to index
    %c0_32 = arith.constant 0 : index
    %62 = vector.load %arg9[%61, %c0_32] : memref<64x128xf32, #tpu.memory_space<vmem>>, vector<8x128xf32>
    tpu.vector_store %arg9[%61, %c0_32], %60 {strides = array<i32>} : memref<64x128xf32, #tpu.memory_space<vmem>>, vector<8x128xf32>,
    %c6_i32 = arith.constant 6 : i32
    %c8_i32_33 = arith.constant 8 : i32
    %63 = arith.muli %c6_i32, %c8_i32_33 : i32
    %64 = tpu.assume_multiple %63, 8 : i32
    %65 = arith.index_cast %64 : i32 to index
    %c0_34 = arith.constant 0 : index
    %66 = vector.load %arg9[%65, %c0_34] : memref<64x128xf32, #tpu.memory_space<vmem>>, vector<8x128xf32>
    %cst_35 = arith.constant dense<0.000000e+00> : vector<8x128xf32>
    %67 = tpu.matmul %60, %7, %cst_35 {dimension_numbers = #tpu.dot_dimension_numbers<[1], [0], [0], [1], [0, 0, 1, 1], [], []>} : vector<8x128xf32>, vector<128x128xf32>, vector<8x128xf32> -> vector<8x128xf32>
    %68 = arith.addf %66, %67 : vector<8x128xf32>
    %69 = math.tanh %68 : vector<8x128xf32>
    %70 = arith.index_cast %64 : i32 to index
    %c0_36 = arith.constant 0 : index
    %71 = vector.load %arg9[%70, %c0_36] : memref<64x128xf32, #tpu.memory_space<vmem>>, vector<8x128xf32>
    tpu.vector_store %arg9[%70, %c0_36], %69 {strides = array<i32>} : memref<64x128xf32, #tpu.memory_space<vmem>>, vector<8x128xf32>,
    %c7_i32 = arith.constant 7 : i32
    %c8_i32_37 = arith.constant 8 : i32
    %72 = arith.muli %c7_i32, %c8_i32_37 : i32
    %73 = tpu.assume_multiple %72, 8 : i32
    %74 = arith.index_cast %73 : i32 to index
    %c0_38 = arith.constant 0 : index
    %75 = vector.load %arg9[%74, %c0_38] : memref<64x128xf32, #tpu.memory_space<vmem>>, vector<8x128xf32>
    %cst_39 = arith.constant dense<0.000000e+00> : vector<8x128xf32>
    %76 = tpu.matmul %69, %7, %cst_39 {dimension_numbers = #tpu.dot_dimension_numbers<[1], [0], [0], [1], [0, 0, 1, 1], [], []>} : vector<8x128xf32>, vector<128x128xf32>, vector<8x128xf32> -> vector<8x128xf32>
    %77 = arith.addf %75, %76 : vector<8x128xf32>
    %78 = math.tanh %77 : vector<8x128xf32>
    %79 = arith.index_cast %73 : i32 to index
    %c0_40 = arith.constant 0 : index
    %80 = vector.load %arg9[%79, %c0_40] : memref<64x128xf32, #tpu.memory_space<vmem>>, vector<8x128xf32>
    tpu.vector_store %arg9[%79, %c0_40], %78 {strides = array<i32>} : memref<64x128xf32, #tpu.memory_space<vmem>>, vector<8x128xf32>,
    %c8_i32_41 = arith.constant 8 : i32
    %c0_42 = arith.constant 0 : index
    %c0_43 = arith.constant 0 : index
    %81 = vector.load %arg8[%c0_42, %c0_43] : memref<8x128xf32, #tpu.memory_space<vmem>>, vector<8x128xf32>
    tpu.vector_store %arg8[%c0_42, %c0_43], %78 {strides = array<i32>} : memref<8x128xf32, #tpu.memory_space<vmem>>, vector<8x128xf32>,
    %c0_44 = arith.constant 0 : index
    %c0_45 = arith.constant 0 : index
    %82 = vector.load %arg9[%c0_44, %c0_45] : memref<64x128xf32, #tpu.memory_space<vmem>>, vector<64x128xf32>
    %c0_46 = arith.constant 0 : index
    %c0_47 = arith.constant 0 : index
    %83 = vector.load %arg5[%c0_46, %c0_47] : memref<128x128xf32, #tpu.memory_space<vmem>>, vector<128x128xf32>
    %cst_48 = arith.constant dense<0.000000e+00> : vector<64x128xf32>
    %84 = tpu.matmul %82, %83, %cst_48 {dimension_numbers = #tpu.dot_dimension_numbers<[1], [0], [0], [1], [0, 0, 1, 1], [], []>} : vector<64x128xf32>, vector<128x128xf32>, vector<64x128xf32> -> vector<64x128xf32>
    %c0_49 = arith.constant 0 : index
    %c0_50 = arith.constant 0 : index
    %85 = vector.load %arg6[%c0_49, %c0_50] : memref<1x128xf32, #tpu.memory_space<vmem>>, vector<1x128xf32>
    %86 = vector.broadcast %85 : vector<1x128xf32> to vector<64x128xf32>
    %87 = arith.addf %84, %86 : vector<64x128xf32>
    %c0_51 = arith.constant 0 : index
    %c0_52 = arith.constant 0 : index
    %88 = vector.load %arg7[%c0_51, %c0_52] : memref<64x128xf32, #tpu.memory_space<vmem>>, vector<64x128xf32>
    tpu.vector_store %arg7[%c0_51, %c0_52], %87 {strides = array<i32>} : memref<64x128xf32, #tpu.memory_space<vmem>>, vector<64x128xf32>,
    return
  }
  func.func @transform_0(%arg0: i32) -> (i32, i32) {
    %c0_i32 = arith.constant 0 : i32
    %c0_i32_0 = arith.constant 0 : i32
    %c0_i32_1 = arith.constant 0 : i32
    return %c0_i32, %c0_i32_0 : i32, i32
  }
  func.func @transform_1(%arg0: i32) -> (i32, i32) {
    %c0_i32 = arith.constant 0 : i32
    %c0_i32_0 = arith.constant 0 : i32
    %c0_i32_1 = arith.constant 0 : i32
    return %c0_i32, %c0_i32_0 : i32, i32
  }
  func.func @transform_2(%arg0: i32) -> (i32, i32) {
    %c0_i32 = arith.constant 0 : i32
    %c0_i32_0 = arith.constant 0 : i32
    %c0_i32_1 = arith.constant 0 : i32
    return %c0_i32, %c0_i32_0 : i32, i32
  }
  func.func @transform_3(%arg0: i32) -> (i32, i32) {
    %c0_i32 = arith.constant 0 : i32
    %c0_i32_0 = arith.constant 0 : i32
    %c0_i32_1 = arith.constant 0 : i32
    return %c0_i32, %c0_i32_0 : i32, i32
  }
  func.func @transform_4(%arg0: i32) -> (i32, i32) {
    %c0_i32 = arith.constant 0 : i32
    %c0_i32_0 = arith.constant 0 : i32
    %c0_i32_1 = arith.constant 0 : i32
    return %c0_i32, %c0_i32_0 : i32, i32
  }
  func.func @transform_5(%arg0: i32) -> (i32, i32) {
    %c0_i32 = arith.constant 0 : i32
    %c0_i32_0 = arith.constant 0 : i32
    %c0_i32_1 = arith.constant 0 : i32
    return %c0_i32, %c0_i32_0 : i32, i32
  }
  func.func @transform_6(%arg0: i32) -> (i32, i32) {
    %c0_i32 = arith.constant 0 : i32
    %c0_i32_0 = arith.constant 0 : i32
    %c0_i32_1 = arith.constant 0 : i32
    return %c0_i32, %c0_i32_0 : i32, i32
  }
  func.func @transform_7(%arg0: i32) -> (i32, i32) {
    %c0_i32 = arith.constant 0 : i32
    %c0_i32_0 = arith.constant 0 : i32
    %c0_i32_1 = arith.constant 0 : i32
    return %c0_i32, %c0_i32_0 : i32, i32
  }
}

</mosaic_0001>

<llo_original>
// kernel: tpu_custom_call.1
$region0: #{tpu_custom_call.1}
  #allocation0 [shape = 'u32[]', space=smem, size = 0x4, offset = 0x4, fixed_abs, tag = 'smem constant byte address 0x4 - core index']
  #allocation1 [shape = 'u32[144,128]{1,0:T(1,128)}', space=vmem, size = 0x12000, scoped, tag = 'internal scratch']
  #allocation2 [shape = 'f32[64,128]{1,0:T(8,128)}', space=vmem, size = 0x8000, scoped, tag = 'scratch operand']
  %s0 = inlined_call_operand.hbm [shape: f32[64,128], index: 0, kind: input, shape index: {}]
  %s1 = inlined_call_operand.hbm [shape: f32[128,128], index: 1, kind: input, shape index: {}]
  %s2 = inlined_call_operand.hbm [shape: f32[128,128], index: 2, kind: input, shape index: {}]
  %s3 = inlined_call_operand.vmem [shape: f32[1,128], index: 3, kind: input, shape index: {}]
  %s4 = inlined_call_operand.hbm [shape: f32[128,128], index: 4, kind: input, shape index: {}]
  %s5 = inlined_call_operand.vmem [shape: f32[1,128], index: 5, kind: input, shape index: {}]
  %s6 = inlined_call_operand.hbm [shape: f32[64,128], index: 6, kind: output, shape index: {0}]
  %s7 = inlined_call_operand.hbm [shape: f32[8,128], index: 7, kind: output, shape index: {1}]
  %8 = xla_tuple %s6, %s7
  %s9 = sld [smem:[#allocation0]]
  $region58: #{tpu_custom_call.1} parent=0
    _
  %s11 = ssub.s32 1, %s9
  %s12 = scalar_select 0, %s11, %s9
  $region1: #{tpu_custom_call.1} parent=0
    #allocation3 [shape = 'u8[32768]{0}', space=vmem, size = 0x8000, scoped, tag = 'input window, operand 0, single buffered']
    #allocation4 [shape = 's32[1]{0}', space=sflag, size = 0x4, scoped, tag = 'scoped memory for tpu_custom_call.1']
    #allocation5 [shape = 's32[1]{0}', space=sflag, size = 0x4, scoped, tag = 'scoped memory for tpu_custom_call.1']
    #allocation6 [shape = 'u8[65536]{0}', space=vmem, size = 0x10000, scoped, tag = 'input window, operand 1, single buffered']
    #allocation7 [shape = 's32[1]{0}', space=sflag, size = 0x4, scoped, tag = 'scoped memory for tpu_custom_call.1']
    #allocation8 [shape = 'u8[65536]{0}', space=vmem, size = 0x10000, scoped, tag = 'input window, operand 2, single buffered']
    #allocation9 [shape = 'u8[65536]{0}', space=vmem, size = 0x10000, scoped, tag = 'input window, operand 4, single buffered']
    #allocation10 [shape = 's32[1]{0}', space=sflag, size = 0x4, scoped, tag = 'scoped memory for tpu_custom_call.1']
    #allocation11 [shape = 'u8[32768]{0}', space=vmem, size = 0x8000, scoped, tag = 'output window, operand 0, single buffered']
    #allocation12 [shape = 'u8[4096]{0}', space=vmem, size = 0x1000, scoped, tag = 'output window, operand 1, single buffered']
    #allocation13 [shape = 's32[1]{0}', space=sflag, size = 0x4, scoped, tag = 'scoped memory for tpu_custom_call.1']
    %13 = vsyncpa [#allocation4], 0
    %14 = vsyncpa [#allocation7], 0
    %15 = vsyncpa [#allocation10], 0
    %16 = vsyncpa [#allocation5], 0
    %17 = vsyncpa [#allocation13], 0
    // Predicated region
    $region2: #{tpu_custom_call.1} parent=1 // pred_check
      _
    $region3: #{tpu_custom_call.1} parent=1 // pred_check_branch
      %19 = sbr.rel (0) target = $region5
    $region4: #{tpu_custom_call.1} parent=1 // pred_region
      %s21 = ssub.s32 1024, 1024
      %22 = vsyncadd [#allocation4], %s21
      %s23 = sshll.u32 [#allocation3], 4
      %s24 = int_to_ptr.vmem [resolvable:$true] %s23
      %29 = dma.hbm_to_vmem [thread:$0]  %s0, 1024, %s24, [#allocation4], 128, 128, 8
    $region5: #{tpu_custom_call.1} parent=1 // pred_fallthru
      _
    // Predicated region
    $region6: #{tpu_custom_call.1} parent=1 // pred_check
      _
    $region7: #{tpu_custom_call.1} parent=1 // pred_check_branch
      %31 = sbr.rel (0) target = $region9
    $region8: #{tpu_custom_call.1} parent=1 // pred_region
      %s33 = ssub.s32 2048, 2048
      %34 = vsyncadd [#allocation7], %s33
      %s35 = sshll.u32 [#allocation6], 4
      %s36 = int_to_ptr.vmem [resolvable:$true] %s35
      %41 = dma.hbm_to_vmem [thread:$0]  %s1, 2048, %s36, [#allocation7], 128, 128, 8
    $region9: #{tpu_custom_call.1} parent=1 // pred_fallthru
      _
    // Predicated region
    $region10: #{tpu_custom_call.1} parent=1 // pred_check
      _
    $region11: #{tpu_custom_call.1} parent=1 // pred_check_branch
      %43 = sbr.rel (0) target = $region13
    $region12: #{tpu_custom_call.1} parent=1 // pred_region
      %s45 = ssub.s32 2048, 2048
      %46 = vsyncadd [#allocation7], %s45
      %s47 = sshll.u32 [#allocation8], 4
      %s48 = int_to_ptr.vmem [resolvable:$true] %s47
      %53 = dma.hbm_to_vmem [thread:$0]  %s2, 2048, %s48, [#allocation7], 128, 128, 8
    $region13: #{tpu_custom_call.1} parent=1 // pred_fallthru
      _
    // Predicated region
    $region14: #{tpu_custom_call.1} parent=1 // pred_check
      _
    $region15: #{tpu_custom_call.1} parent=1 // pred_check_branch
      %55 = sbr.rel (0) target = $region17
    $region16: #{tpu_custom_call.1} parent=1 // pred_region
      _
    $region17: #{tpu_custom_call.1} parent=1 // pred_fallthru
      _
    // Predicated region
    $region18: #{tpu_custom_call.1} parent=1 // pred_check
      _
    $region19: #{tpu_custom_call.1} parent=1 // pred_check_branch
      %57 = sbr.rel (0) target = $region21
    $region20: #{tpu_custom_call.1} parent=1 // pred_region
      %s59 = ssub.s32 2048, 2048
      %60 = vsyncadd [#allocation10], %s59
      %s61 = sshll.u32 [#allocation9], 4
      %s62 = int_to_ptr.vmem [resolvable:$true] %s61
      %67 = dma.hbm_to_vmem [thread:$0]  %s4, 2048, %s62, [#allocation10], 128, 128, 8
    $region21: #{tpu_custom_call.1} parent=1 // pred_fallthru
      _
    // Predicated region
    $region22: #{tpu_custom_call.1} parent=1 // pred_check
      _
    $region23: #{tpu_custom_call.1} parent=1 // pred_check_branch
      %69 = sbr.rel (0) target = $region25
    $region24: #{tpu_custom_call.1} parent=1 // pred_region
      _
    $region25: #{tpu_custom_call.1} parent=1 // pred_fallthru
      _
    // Predicated region
    $region26: #{tpu_custom_call.1} parent=1 // pred_check
      _
    $region27: #{tpu_custom_call.1} parent=1 // pred_check_branch
      %71 = sbr.rel (0) target = $region29
    $region28: #{tpu_custom_call.1} parent=1 // pred_region
      %72 = dma.done [#allocation4], 1024
    $region29: #{tpu_custom_call.1} parent=1 // pred_fallthru
      _
    // Predicated region
    $region30: #{tpu_custom_call.1} parent=1 // pred_check
      _
    $region31: #{tpu_custom_call.1} parent=1 // pred_check_branch
      %74 = sbr.rel (0) target = $region33
    $region32: #{tpu_custom_call.1} parent=1 // pred_region
      %75 = dma.done [#allocation7], 2048
    $region33: #{tpu_custom_call.1} parent=1 // pred_fallthru
      _
    // Predicated region
    $region34: #{tpu_custom_call.1} parent=1 // pred_check
      _
    $region35: #{tpu_custom_call.1} parent=1 // pred_check_branch
      %77 = sbr.rel (0) target = $region37
    $region36: #{tpu_custom_call.1} parent=1 // pred_region
      %78 = dma.done [#allocation7], 2048
    $region37: #{tpu_custom_call.1} parent=1 // pred_fallthru
      _
    // Predicated region
    $region38: #{tpu_custom_call.1} parent=1 // pred_check
      _
    $region39: #{tpu_custom_call.1} parent=1 // pred_check_branch
      %80 = sbr.rel (0) target = $region41
    $region40: #{tpu_custom_call.1} parent=1 // pred_region
      %81 = dma.done [#allocation10], 2048
    $region41: #{tpu_custom_call.1} parent=1 // pred_fallthru
      _
    %v82 = vld [vmem:[#allocation3] sm:$0xff]
    %v83 = vld [vmem:[#allocation3 + $0x8] sm:$0xff]
    %v84 = vld [vmem:[#allocation3 + $0x10] sm:$0xff]
    %v85 = vld [vmem:[#allocation3 + $0x18] sm:$0xff]
    %v86 = vld [vmem:[#allocation3 + $0x20] sm:$0xff]
    %v87 = vld [vmem:[#allocation3 + $0x28] sm:$0xff]
    %v88 = vld [vmem:[#allocation3 + $0x30] sm:$0xff]
    %v89 = vld [vmem:[#allocation3 + $0x38] sm:$0xff]
    %v90 = vld [vmem:[#allocation6] sm:$0xff]
    %v91 = vld [vmem:[#allocation6 + $0x8] sm:$0xff]
    %v92 = vld [vmem:[#allocation6 + $0x10] sm:$0xff]
    %v93 = vld [vmem:[#allocation6 + $0x18] sm:$0xff]
    %v94 = vld [vmem:[#allocation6 + $0x20] sm:$0xff]
    %v95 = vld [vmem:[#allocation6 + $0x28] sm:$0xff]
    %v96 = vld [vmem:[#allocation6 + $0x30] sm:$0xff]
    %v97 = vld [vmem:[#allocation6 + $0x38] sm:$0xff]
    %v98 = vld [vmem:[#allocation6 + $0x40] sm:$0xff]
    %v99 = vld [vmem:[#allocation6 + $0x48] sm:$0xff]
    %v100 = vld [vmem:[#allocation6 + $0x50] sm:$0xff]
    %v101 = vld [vmem:[#allocation6 + $0x58] sm:$0xff]
    %v102 = vld [vmem:[#allocation6 + $0x60] sm:$0xff]
    %v103 = vld [vmem:[#allocation6 + $0x68] sm:$0xff]
    %v104 = vld [vmem:[#allocation6 + $0x70] sm:$0xff]
    %v105 = vld [vmem:[#allocation6 + $0x78] sm:$0xff]
    %v106 = vld [vmem:[%s3] sm:$0x1]
    %v108 = vlaneseq
    %v109 = vshrl.u32 %v108, 7
    %v110 = vsub.s32 0, %v109
    %v111 = vrot.slane %v106, %v110
    %113 = vmatprep.subr.mxu0 0.0
    %114 = vmatpush1.msra.mxu0 %v90
    %115 = vmatprep.subr.mxu0 0.0
    %116 = vmatpush1.msra.mxu0 %v91
    %117 = vmatprep.subr.mxu0 0.0
    %118 = vmatpush1.msra.mxu0 %v92
    %119 = vmatprep.subr.mxu0 0.0
    %120 = vmatpush1.msra.mxu0 %v93
    %121 = vmatprep.subr.mxu0 0.0
    %122 = vmatpush1.msra.mxu0 %v94
    %123 = vmatprep.subr.mxu0 0.0
    %124 = vmatpush1.msra.mxu0 %v95
    %125 = vmatprep.subr.mxu0 0.0
    %126 = vmatpush1.msra.mxu0 %v96
    %127 = vmatprep.subr.mxu0 0.0
    %128 = vmatpush1.msra.mxu0 %v97
    %129 = vmatprep.subr.mxu0 0.0
    %130 = vmatpush1.msra.mxu0 %v98
    %131 = vmatprep.subr.mxu0 0.0
    %132 = vmatpush1.msra.mxu0 %v99
    %133 = vmatprep.subr.mxu0 0.0
    %134 = vmatpush1.msra.mxu0 %v100
    %135 = vmatprep.subr.mxu0 0.0
    %136 = vmatpush1.msra.mxu0 %v101
    %137 = vmatprep.subr.mxu0 0.0
    %138 = vmatpush1.msra.mxu0 %v102
    %139 = vmatprep.subr.mxu0 0.0
    %140 = vmatpush1.msra.mxu0 %v103
    %141 = vmatprep.subr.mxu0 0.0
    %142 = vmatpush1.msra.mxu0 %v104
    %143 = vmatprep.subr.mxu0 0.0
    %144 = vmatpush1.msra.mxu0 %v105
    %145 = vmatprep.subr.mxu0 0.0
    %146 = vmatpush1.msra.mxu0 0.0
    %147 = vmatprep.subr.mxu0 0.0
    %148 = vmatpush1.msra.mxu0 0.0
    %149 = vmatprep.subr.mxu0 0.0
    %150 = vmatpush1.msra.mxu0 0.0
    %151 = vmatprep.subr.mxu0 0.0
    %152 = vmatpush1.msra.mxu0 0.0
    %153 = vmatprep.subr.mxu0 0.0
    %154 = vmatpush1.msra.mxu0 0.0
    %155 = vmatprep.subr.mxu0 0.0
    %156 = vmatpush1.msra.mxu0 0.0
    %157 = vmatprep.subr.mxu0 0.0
    %158 = vmatpush1.msra.mxu0 0.0
    %159 = vmatprep.subr.mxu0 0.0
    %160 = vmatpush1.msra.mxu0 0.0
    %161 = vmatprep.subr.mxu0 0.0
    %162 = vmatpush1.msra.mxu0 0.0
    %163 = vmatprep.subr.mxu0 0.0
    %164 = vmatpush1.msra.mxu0 0.0
    %165 = vmatprep.subr.mxu0 0.0
    %166 = vmatpush1.msra.mxu0 0.0
    %167 = vmatprep.subr.mxu0 0.0
    %168 = vmatpush1.msra.mxu0 0.0
    %169 = vmatprep.subr.mxu0 0.0
    %170 = vmatpush1.msra.mxu0 0.0
    %171 = vmatprep.subr.mxu0 0.0
    %172 = vmatpush1.msra.mxu0 0.0
    %173 = vmatprep.subr.mxu0 0.0
    %174 = vmatpush1.msra.mxu0 0.0
    %175 = vmatprep.subr.mxu0 0.0
    %176 = vmatpush1.msra.mxu0 0.0
    %177 = vmatprep.mubr.f32.mxu0 0.0
    %178 = vmatmul.mubr.f32.gmra.mrb[0].mxu0 %v82
    %v179 = vpop.f32.mrb[0].mxu0
    %v180 = vadd.f32 %v111, %v179
    %v181 = vpop.f32.mrb[0].mxu0
    %182 = vmatprep.mubr.f32.mxu0 0.0
    %183 = vmatmul.mubr.f32.gmra.mrb[0].mxu0 %v83
    %v184 = vpop.f32.mrb[0].mxu0
    %v185 = vadd.f32 %v111, %v184
    %v186 = vpop.f32.mrb[0].mxu0
    %187 = vmatprep.mubr.f32.mxu0 0.0
    %188 = vmatmul.mubr.f32.gmra.mrb[0].mxu0 %v84
    %v189 = vpop.f32.mrb[0].mxu0
    %v190 = vadd.f32 %v111, %v189
    %v191 = vpop.f32.mrb[0].mxu0
    %192 = vmatprep.mubr.f32.mxu0 0.0
    %193 = vmatmul.mubr.f32.gmra.mrb[0].mxu0 %v85
    %v194 = vpop.f32.mrb[0].mxu0
    %v195 = vadd.f32 %v111, %v194
    %v196 = vpop.f32.mrb[0].mxu0
    %197 = vmatprep.mubr.f32.mxu0 0.0
    %198 = vmatmul.mubr.f32.gmra.mrb[0].mxu0 %v86
    %v199 = vpop.f32.mrb[0].mxu0
    %v200 = vadd.f32 %v111, %v199
    %v201 = vpop.f32.mrb[0].mxu0
    %202 = vmatprep.mubr.f32.mxu0 0.0
    %203 = vmatmul.mubr.f32.gmra.mrb[0].mxu0 %v87
    %v204 = vpop.f32.mrb[0].mxu0
    %v205 = vadd.f32 %v111, %v204
    %v206 = vpop.f32.mrb[0].mxu0
    %207 = vmatprep.mubr.f32.mxu0 0.0
    %208 = vmatmul.mubr.f32.gmra.mrb[0].mxu0 %v88
    %v209 = vpop.f32.mrb[0].mxu0
    %v210 = vadd.f32 %v111, %v209
    %v211 = vpop.f32.mrb[0].mxu0
    %212 = vmatprep.mubr.f32.mxu0 0.0
    %213 = vmatmul.mubr.f32.gmra.mrb[0].mxu0 %v89
    %v214 = vpop.f32.mrb[0].mxu0
    %v215 = vadd.f32 %v111, %v214
    %v216 = vpop.f32.mrb[0].mxu0
    %217 = vdwg.mxu0
    %218 = vst [vmem:[#allocation2] sm:$0xff] %v180
    %219 = vst [vmem:[#allocation2 + $0x8] sm:$0xff] %v185
    %220 = vst [vmem:[#allocation2 + $0x10] sm:$0xff] %v190
    %221 = vst [vmem:[#allocation2 + $0x18] sm:$0xff] %v195
    %222 = vst [vmem:[#allocation2 + $0x20] sm:$0xff] %v200
    %223 = vst [vmem:[#allocation2 + $0x28] sm:$0xff] %v205
    %224 = vst [vmem:[#allocation2 + $0x30] sm:$0xff] %v210
    %225 = vst [vmem:[#allocation2 + $0x38] sm:$0xff] %v215
    %v226 = vld [vmem:[#allocation8] sm:$0xff]
    %v227 = vld [vmem:[#allocation8 + $0x8] sm:$0xff]
    %v228 = vld [vmem:[#allocation8 + $0x10] sm:$0xff]
    %v229 = vld [vmem:[#allocation8 + $0x18] sm:$0xff]
    %v230 = vld [vmem:[#allocation8 + $0x20] sm:$0xff]
    %v231 = vld [vmem:[#allocation8 + $0x28] sm:$0xff]
    %v232 = vld [vmem:[#allocation8 + $0x30] sm:$0xff]
    %v233 = vld [vmem:[#allocation8 + $0x38] sm:$0xff]
    %v234 = vld [vmem:[#allocation8 + $0x40] sm:$0xff]
    %v235 = vld [vmem:[#allocation8 + $0x48] sm:$0xff]
    %v236 = vld [vmem:[#allocation8 + $0x50] sm:$0xff]
    %v237 = vld [vmem:[#allocation8 + $0x58] sm:$0xff]
    %v238 = vld [vmem:[#allocation8 + $0x60] sm:$0xff]
    %v239 = vld [vmem:[#allocation8 + $0x68] sm:$0xff]
    %v240 = vld [vmem:[#allocation8 + $0x70] sm:$0xff]
    %v241 = vld [vmem:[#allocation8 + $0x78] sm:$0xff]
    %v242 = vld [vmem:[#allocation2] sm:$0xff]
    %243 = vmatprep.subr.mxu0 0.0
    %244 = vmatpush1.msra.mxu0 %v226
    %245 = vmatprep.subr.mxu0 0.0
    %246 = vmatpush1.msra.mxu0 %v227
    %247 = vmatprep.subr.mxu0 0.0
    %248 = vmatpush1.msra.mxu0 %v228
    %249 = vmatprep.subr.mxu0 0.0
    %250 = vmatpush1.msra.mxu0 %v229
    %251 = vmatprep.subr.mxu0 0.0
    %252 = vmatpush1.msra.mxu0 %v230
    %253 = vmatprep.subr.mxu0 0.0
    %254 = vmatpush1.msra.mxu0 %v231
    %255 = vmatprep.subr.mxu0 0.0
    %256 = vmatpush1.msra.mxu0 %v232
    %257 = vmatprep.subr.mxu0 0.0
    %258 = vmatpush1.msra.mxu0 %v233
    %259 = vmatprep.subr.mxu0 0.0
    %260 = vmatpush1.msra.mxu0 %v234
    %261 = vmatprep.subr.mxu0 0.0
    %262 = vmatpush1.msra.mxu0 %v235
    %263 = vmatprep.subr.mxu0 0.0
    %264 = vmatpush1.msra.mxu0 %v236
    %265 = vmatprep.subr.mxu0 0.0
    %266 = vmatpush1.msra.mxu0 %v237
    %267 = vmatprep.subr.mxu0 0.0
    %268 = vmatpush1.msra.mxu0 %v238
    %269 = vmatprep.subr.mxu0 0.0
    %270 = vmatpush1.msra.mxu0 %v239
    %271 = vmatprep.subr.mxu0 0.0
    %272 = vmatpush1.msra.mxu0 %v240
    %273 = vmatprep.subr.mxu0 0.0
    %274 = vmatpush1.msra.mxu0 %v241
    %275 = vmatprep.subr.mxu0 0.0
    %276 = vmatpush1.msra.mxu0 0.0
    %277 = vmatprep.subr.mxu0 0.0
    %278 = vmatpush1.msra.mxu0 0.0
    %279 = vmatprep.subr.mxu0 0.0
    %280 = vmatpush1.msra.mxu0 0.0
    %281 = vmatprep.subr.mxu0 0.0
    %282 = vmatpush1.msra.mxu0 0.0
    %283 = vmatprep.subr.mxu0 0.0
    %284 = vmatpush1.msra.mxu0 0.0
    %285 = vmatprep.subr.mxu0 0.0
    %286 = vmatpush1.msra.mxu0 0.0
    %287 = vmatprep.subr.mxu0 0.0
    %288 = vmatpush1.msra.mxu0 0.0
    %289 = vmatprep.subr.mxu0 0.0
    %290 = vmatpush1.msra.mxu0 0.0
    %291 = vmatprep.subr.mxu0 0.0
    %292 = vmatpush1.msra.mxu0 0.0
    %293 = vmatprep.subr.mxu0 0.0
    %294 = vmatpush1.msra.mxu0 0.0
    %295 = vmatprep.subr.mxu0 0.0
    %296 = vmatpush1.msra.mxu0 0.0
    %297 = vmatprep.subr.mxu0 0.0
    %298 = vmatpush1.msra.mxu0 0.0
    %299 = vmatprep.subr.mxu0 0.0
    %300 = vmatpush1.msra.mxu0 0.0
    %301 = vmatprep.subr.mxu0 0.0
    %302 = vmatpush1.msra.mxu0 0.0
    %303 = vmatprep.subr.mxu0 0.0
    %304 = vmatpush1.msra.mxu0 0.0
    %305 = vmatprep.subr.mxu0 0.0
    %306 = vmatpush1.msra.mxu0 0.0
    %307 = vmatprep.mubr.f32.mxu0 0.0
    %308 = vmatmul.mubr.f32.gmra.mrb[0].mxu0 0.0
    %v309 = vpop.f32.mrb[0].mxu0
    %v310 = vadd.f32 0.0, %v309
    %v311 = vpop.f32.mrb[0].mxu0
    %312 = vdwg.mxu0
    %v313 = vadd.f32 %v242, %v310
    %v314 = vtanh.pop %v313
    %315 = vst [vmem:[#allocation2] sm:$0xff] %v314
    %s316 = scalar_lea.vmem [#allocation2], 8
    %v317 = vld [vmem:[%s316] sm:$0xff]
    %318 = vmatprep.subr.mxu0 0.0
    %319 = vmatpush1.msra.mxu0 %v226
    %320 = vmatprep.subr.mxu0 0.0
    %321 = vmatpush1.msra.mxu0 %v227
    %322 = vmatprep.subr.mxu0 0.0
    %323 = vmatpush1.msra.mxu0 %v228
    %324 = vmatprep.subr.mxu0 0.0
    %325 = vmatpush1.msra.mxu0 %v229
    %326 = vmatprep.subr.mxu0 0.0
    %327 = vmatpush1.msra.mxu0 %v230
    %328 = vmatprep.subr.mxu0 0.0
    %329 = vmatpush1.msra.mxu0 %v231
    %330 = vmatprep.subr.mxu0 0.0
    %331 = vmatpush1.msra.mxu0 %v232
    %332 = vmatprep.subr.mxu0 0.0
    %333 = vmatpush1.msra.mxu0 %v233
    %334 = vmatprep.subr.mxu0 0.0
    %335 = vmatpush1.msra.mxu0 %v234
    %336 = vmatprep.subr.mxu0 0.0
    %337 = vmatpush1.msra.mxu0 %v235
    %338 = vmatprep.subr.mxu0 0.0
    %339 = vmatpush1.msra.mxu0 %v236
    %340 = vmatprep.subr.mxu0 0.0
    %341 = vmatpush1.msra.mxu0 %v237
    %342 = vmatprep.subr.mxu0 0.0
    %343 = vmatpush1.msra.mxu0 %v238
    %344 = vmatprep.subr.mxu0 0.0
    %345 = vmatpush1.msra.mxu0 %v239
    %346 = vmatprep.subr.mxu0 0.0
    %347 = vmatpush1.msra.mxu0 %v240
    %348 = vmatprep.subr.mxu0 0.0
    %349 = vmatpush1.msra.mxu0 %v241
    %350 = vmatprep.subr.mxu0 0.0
    %351 = vmatpush1.msra.mxu0 0.0
    %352 = vmatprep.subr.mxu0 0.0
    %353 = vmatpush1.msra.mxu0 0.0
    %354 = vmatprep.subr.mxu0 0.0
    %355 = vmatpush1.msra.mxu0 0.0
    %356 = vmatprep.subr.mxu0 0.0
    %357 = vmatpush1.msra.mxu0 0.0
    %358 = vmatprep.subr.mxu0 0.0
    %359 = vmatpush1.msra.mxu0 0.0
    %360 = vmatprep.subr.mxu0 0.0
    %361 = vmatpush1.msra.mxu0 0.0
    %362 = vmatprep.subr.mxu0 0.0
    %363 = vmatpush1.msra.mxu0 0.0
    %364 = vmatprep.subr.mxu0 0.0
    %365 = vmatpush1.msra.mxu0 0.0
    %366 = vmatprep.subr.mxu0 0.0
    %367 = vmatpush1.msra.mxu0 0.0
    %368 = vmatprep.subr.mxu0 0.0
    %369 = vmatpush1.msra.mxu0 0.0
    %370 = vmatprep.subr.mxu0 0.0
    %371 = vmatpush1.msra.mxu0 0.0
    %372 = vmatprep.subr.mxu0 0.0
    %373 = vmatpush1.msra.mxu0 0.0
    %374 = vmatprep.subr.mxu0 0.0
    %375 = vmatpush1.msra.mxu0 0.0
    %376 = vmatprep.subr.mxu0 0.0
    %377 = vmatpush1.msra.mxu0 0.0
    %378 = vmatprep.subr.mxu0 0.0
    %379 = vmatpush1.msra.mxu0 0.0
    %380 = vmatprep.subr.mxu0 0.0
    %381 = vmatpush1.msra.mxu0 0.0
    %382 = vmatprep.mubr.f32.mxu0 0.0
    %383 = vmatmul.mubr.f32.gmra.mrb[0].mxu0 %v314
    %v384 = vpop.f32.mrb[0].mxu0
    %v385 = vadd.f32 0.0, %v384
    %v386 = vpop.f32.mrb[0].mxu0
    %387 = vdwg.mxu0
    %v388 = vadd.f32 %v317, %v385
    %v389 = vtanh.pop %v388
    %390 = vst [vmem:[%s316] sm:$0xff] %v389
    %s391 = scalar_lea.vmem [#allocation2], 16
    %v392 = vld [vmem:[%s391] sm:$0xff]
    %393 = vmatprep.subr.mxu0 0.0
    %394 = vmatpush1.msra.mxu0 %v226
    %395 = vmatprep.subr.mxu0 0.0
    %396 = vmatpush1.msra.mxu0 %v227
    %397 = vmatprep.subr.mxu0 0.0
    %398 = vmatpush1.msra.mxu0 %v228
    %399 = vmatprep.subr.mxu0 0.0
    %400 = vmatpush1.msra.mxu0 %v229
    %401 = vmatprep.subr.mxu0 0.0
    %402 = vmatpush1.msra.mxu0 %v230
    %403 = vmatprep.subr.mxu0 0.0
    %404 = vmatpush1.msra.mxu0 %v231
    %405 = vmatprep.subr.mxu0 0.0
    %406 = vmatpush1.msra.mxu0 %v232
    %407 = vmatprep.subr.mxu0 0.0
    %408 = vmatpush1.msra.mxu0 %v233
    %409 = vmatprep.subr.mxu0 0.0
    %410 = vmatpush1.msra.mxu0 %v234
    %411 = vmatprep.subr.mxu0 0.0
    %412 = vmatpush1.msra.mxu0 %v235
    %413 = vmatprep.subr.mxu0 0.0
    %414 = vmatpush1.msra.mxu0 %v236
    %415 = vmatprep.subr.mxu0 0.0
    %416 = vmatpush1.msra.mxu0 %v237
    %417 = vmatprep.subr.mxu0 0.0
    %418 = vmatpush1.msra.mxu0 %v238
    %419 = vmatprep.subr.mxu0 0.0
    %420 = vmatpush1.msra.mxu0 %v239
    %421 = vmatprep.subr.mxu0 0.0
    %422 = vmatpush1.msra.mxu0 %v240
    %423 = vmatprep.subr.mxu0 0.0
    %424 = vmatpush1.msra.mxu0 %v241
    %425 = vmatprep.subr.mxu0 0.0
    %426 = vmatpush1.msra.mxu0 0.0
    %427 = vmatprep.subr.mxu0 0.0
    %428 = vmatpush1.msra.mxu0 0.0
    %429 = vmatprep.subr.mxu0 0.0
    %430 = vmatpush1.msra.mxu0 0.0
    %431 = vmatprep.subr.mxu0 0.0
    %432 = vmatpush1.msra.mxu0 0.0
    %433 = vmatprep.subr.mxu0 0.0
    %434 = vmatpush1.msra.mxu0 0.0
    %435 = vmatprep.subr.mxu0 0.0
    %436 = vmatpush1.msra.mxu0 0.0
    %437 = vmatprep.subr.mxu0 0.0
    %438 = vmatpush1.msra.mxu0 0.0
    %439 = vmatprep.subr.mxu0 0.0
    %440 = vmatpush1.msra.mxu0 0.0
    %441 = vmatprep.subr.mxu0 0.0
    %442 = vmatpush1.msra.mxu0 0.0
    %443 = vmatprep.subr.mxu0 0.0
    %444 = vmatpush1.msra.mxu0 0.0
    %445 = vmatprep.subr.mxu0 0.0
    %446 = vmatpush1.msra.mxu0 0.0
    %447 = vmatprep.subr.mxu0 0.0
    %448 = vmatpush1.msra.mxu0 0.0
    %449 = vmatprep.subr.mxu0 0.0
    %450 = vmatpush1.msra.mxu0 0.0
    %451 = vmatprep.subr.mxu0 0.0
    %452 = vmatpush1.msra.mxu0 0.0
    %453 = vmatprep.subr.mxu0 0.0
    %454 = vmatpush1.msra.mxu0 0.0
    %455 = vmatprep.subr.mxu0 0.0
    %456 = vmatpush1.msra.mxu0 0.0
    %457 = vmatprep.mubr.f32.mxu0 0.0
    %458 = vmatmul.mubr.f32.gmra.mrb[0].mxu0 %v389
    %v459 = vpop.f32.mrb[0].mxu0
    %v460 = vadd.f32 0.0, %v459
    %v461 = vpop.f32.mrb[0].mxu0
    %462 = vdwg.mxu0
    %v463 = vadd.f32 %v392, %v460
    %v464 = vtanh.pop %v463
    %465 = vst [vmem:[%s391] sm:$0xff] %v464
    %s466 = scalar_lea.vmem [#allocation2], 24
    %v467 = vld [vmem:[%s466] sm:$0xff]
    %468 = vmatprep.subr.mxu0 0.0
    %469 = vmatpush1.msra.mxu0 %v226
    %470 = vmatprep.subr.mxu0 0.0
    %471 = vmatpush1.msra.mxu0 %v227
    %472 = vmatprep.subr.mxu0 0.0
    %473 = vmatpush1.msra.mxu0 %v228
    %474 = vmatprep.subr.mxu0 0.0
    %475 = vmatpush1.msra.mxu0 %v229
    %476 = vmatprep.subr.mxu0 0.0
    %477 = vmatpush1.msra.mxu0 %v230
    %478 = vmatprep.subr.mxu0 0.0
    %479 = vmatpush1.msra.mxu0 %v231
    %480 = vmatprep.subr.mxu0 0.0
    %481 = vmatpush1.msra.mxu0 %v232
    %482 = vmatprep.subr.mxu0 0.0
    %483 = vmatpush1.msra.mxu0 %v233
    %484 = vmatprep.subr.mxu0 0.0
    %485 = vmatpush1.msra.mxu0 %v234
    %486 = vmatprep.subr.mxu0 0.0
    %487 = vmatpush1.msra.mxu0 %v235
    %488 = vmatprep.subr.mxu0 0.0
    %489 = vmatpush1.msra.mxu0 %v236
    %490 = vmatprep.subr.mxu0 0.0
    %491 = vmatpush1.msra.mxu0 %v237
    %492 = vmatprep.subr.mxu0 0.0
    %493 = vmatpush1.msra.mxu0 %v238
    %494 = vmatprep.subr.mxu0 0.0
    %495 = vmatpush1.msra.mxu0 %v239
    %496 = vmatprep.subr.mxu0 0.0
    %497 = vmatpush1.msra.mxu0 %v240
    %498 = vmatprep.subr.mxu0 0.0
    %499 = vmatpush1.msra.mxu0 %v241
    %500 = vmatprep.subr.mxu0 0.0
    %501 = vmatpush1.msra.mxu0 0.0
    %502 = vmatprep.subr.mxu0 0.0
    %503 = vmatpush1.msra.mxu0 0.0
    %504 = vmatprep.subr.mxu0 0.0
    %505 = vmatpush1.msra.mxu0 0.0
    %506 = vmatprep.subr.mxu0 0.0
    %507 = vmatpush1.msra.mxu0 0.0
    %508 = vmatprep.subr.mxu0 0.0
    %509 = vmatpush1.msra.mxu0 0.0
    %510 = vmatprep.subr.mxu0 0.0
    %511 = vmatpush1.msra.mxu0 0.0
    %512 = vmatprep.subr.mxu0 0.0
    %513 = vmatpush1.msra.mxu0 0.0
    %514 = vmatprep.subr.mxu0 0.0
    %515 = vmatpush1.msra.mxu0 0.0
    %516 = vmatprep.subr.mxu0 0.0
    %517 = vmatpush1.msra.mxu0 0.0
    %518 = vmatprep.subr.mxu0 0.0
    %519 = vmatpush1.msra.mxu0 0.0
    %520 = vmatprep.subr.mxu0 0.0
    %521 = vmatpush1.msra.mxu0 0.0
    %522 = vmatprep.subr.mxu0 0.0
    %523 = vmatpush1.msra.mxu0 0.0
    %524 = vmatprep.subr.mxu0 0.0
    %525 = vmatpush1.msra.mxu0 0.0
    %526 = vmatprep.subr.mxu0 0.0
    %527 = vmatpush1.msra.mxu0 0.0
    %528 = vmatprep.subr.mxu0 0.0
    %529 = vmatpush1.msra.mxu0 0.0
    %530 = vmatprep.subr.mxu0 0.0
    %531 = vmatpush1.msra.mxu0 0.0
    %532 = vmatprep.mubr.f32.mxu0 0.0
    %533 = vmatmul.mubr.f32.gmra.mrb[0].mxu0 %v464
    %v534 = vpop.f32.mrb[0].mxu0
    %v535 = vadd.f32 0.0, %v534
    %v536 = vpop.f32.mrb[0].mxu0
    %537 = vdwg.mxu0
    %v538 = vadd.f32 %v467, %v535
    %v539 = vtanh.pop %v538
    %540 = vst [vmem:[%s466] sm:$0xff] %v539
    %s541 = scalar_lea.vmem [#allocation2], 32
    %v542 = vld [vmem:[%s541] sm:$0xff]
    %543 = vmatprep.subr.mxu0 0.0
    %544 = vmatpush1.msra.mxu0 %v226
    %545 = vmatprep.subr.mxu0 0.0
    %546 = vmatpush1.msra.mxu0 %v227
    %547 = vmatprep.subr.mxu0 0.0
    %548 = vmatpush1.msra.mxu0 %v228
    %549 = vmatprep.subr.mxu0 0.0
    %550 = vmatpush1.msra.mxu0 %v229
    %551 = vmatprep.subr.mxu0 0.0
    %552 = vmatpush1.msra.mxu0 %v230
    %553 = vmatprep.subr.mxu0 0.0
    %554 = vmatpush1.msra.mxu0 %v231
    %555 = vmatprep.subr.mxu0 0.0
    %556 = vmatpush1.msra.mxu0 %v232
    %557 = vmatprep.subr.mxu0 0.0
    %558 = vmatpush1.msra.mxu0 %v233
    %559 = vmatprep.subr.mxu0 0.0
    %560 = vmatpush1.msra.mxu0 %v234
    %561 = vmatprep.subr.mxu0 0.0
    %562 = vmatpush1.msra.mxu0 %v235
    %563 = vmatprep.subr.mxu0 0.0
    %564 = vmatpush1.msra.mxu0 %v236
    %565 = vmatprep.subr.mxu0 0.0
    %566 = vmatpush1.msra.mxu0 %v237
    %567 = vmatprep.subr.mxu0 0.0
    %568 = vmatpush1.msra.mxu0 %v238
    %569 = vmatprep.subr.mxu0 0.0
    %570 = vmatpush1.msra.mxu0 %v239
    %571 = vmatprep.subr.mxu0 0.0
    %572 = vmatpush1.msra.mxu0 %v240
    %573 = vmatprep.subr.mxu0 0.0
    %574 = vmatpush1.msra.mxu0 %v241
    %575 = vmatprep.subr.mxu0 0.0
    %576 = vmatpush1.msra.mxu0 0.0
    %577 = vmatprep.subr.mxu0 0.0
    %578 = vmatpush1.msra.mxu0 0.0
    %579 = vmatprep.subr.mxu0 0.0
    %580 = vmatpush1.msra.mxu0 0.0
    %581 = vmatprep.subr.mxu0 0.0
    %582 = vmatpush1.msra.mxu0 0.0
    %583 = vmatprep.subr.mxu0 0.0
    %584 = vmatpush1.msra.mxu0 0.0
    %585 = vmatprep.subr.mxu0 0.0
    %586 = vmatpush1.msra.mxu0 0.0
    %587 = vmatprep.subr.mxu0 0.0
    %588 = vmatpush1.msra.mxu0 0.0
    %589 = vmatprep.subr.mxu0 0.0
    %590 = vmatpush1.msra.mxu0 0.0
    %591 = vmatprep.subr.mxu0 0.0
    %592 = vmatpush1.msra.mxu0 0.0
    %593 = vmatprep.subr.mxu0 0.0
    %594 = vmatpush1.msra.mxu0 0.0
    %595 = vmatprep.subr.mxu0 0.0
    %596 = vmatpush1.msra.mxu0 0.0
    %597 = vmatprep.subr.mxu0 0.0
    %598 = vmatpush1.msra.mxu0 0.0
    %599 = vmatprep.subr.mxu0 0.0
    %600 = vmatpush1.msra.mxu0 0.0
    %601 = vmatprep.subr.mxu0 0.0
    %602 = vmatpush1.msra.mxu0 0.0
    %603 = vmatprep.subr.mxu0 0.0
    %604 = vmatpush1.msra.mxu0 0.0
    %605 = vmatprep.subr.mxu0 0.0
    %606 = vmatpush1.msra.mxu0 0.0
    %607 = vmatprep.mubr.f32.mxu0 0.0
    %608 = vmatmul.mubr.f32.gmra.mrb[0].mxu0 %v539
    %v609 = vpop.f32.mrb[0].mxu0
    %v610 = vadd.f32 0.0, %v609
    %v611 = vpop.f32.mrb[0].mxu0
    %612 = vdwg.mxu0
    %v613 = vadd.f32 %v542, %v610
    %v614 = vtanh.pop %v613
    %615 = vst [vmem:[%s541] sm:$0xff] %v614
    %s616 = scalar_lea.vmem [#allocation2], 40
    %v617 = vld [vmem:[%s616] sm:$0xff]
    %618 = vmatprep.subr.mxu0 0.0
    %619 = vmatpush1.msra.mxu0 %v226
    %620 = vmatprep.subr.mxu0 0.0
    %621 = vmatpush1.msra.mxu0 %v227
    %622 = vmatprep.subr.mxu0 0.0
    %623 = vmatpush1.msra.mxu0 %v228
    %624 = vmatprep.subr.mxu0 0.0
    %625 = vmatpush1.msra.mxu0 %v229
    %626 = vmatprep.subr.mxu0 0.0
    %627 = vmatpush1.msra.mxu0 %v230
    %628 = vmatprep.subr.mxu0 0.0
    %629 = vmatpush1.msra.mxu0 %v231
    %630 = vmatprep.subr.mxu0 0.0
    %631 = vmatpush1.msra.mxu0 %v232
    %632 = vmatprep.subr.mxu0 0.0
    %633 = vmatpush1.msra.mxu0 %v233
    %634 = vmatprep.subr.mxu0 0.0
    %635 = vmatpush1.msra.mxu0 %v234
    %636 = vmatprep.subr.mxu0 0.0
    %637 = vmatpush1.msra.mxu0 %v235
    %638 = vmatprep.subr.mxu0 0.0
    %639 = vmatpush1.msra.mxu0 %v236
    %640 = vmatprep.subr.mxu0 0.0
    %641 = vmatpush1.msra.mxu0 %v237
    %642 = vmatprep.subr.mxu0 0.0
    %643 = vmatpush1.msra.mxu0 %v238
    %644 = vmatprep.subr.mxu0 0.0
    %645 = vmatpush1.msra.mxu0 %v239
    %646 = vmatprep.subr.mxu0 0.0
    %647 = vmatpush1.msra.mxu0 %v240
    %648 = vmatprep.subr.mxu0 0.0
    %649 = vmatpush1.msra.mxu0 %v241
    %650 = vmatprep.subr.mxu0 0.0
    %651 = vmatpush1.msra.mxu0 0.0
    %652 = vmatprep.subr.mxu0 0.0
    %653 = vmatpush1.msra.mxu0 0.0
    %654 = vmatprep.subr.mxu0 0.0
    %655 = vmatpush1.msra.mxu0 0.0
    %656 = vmatprep.subr.mxu0 0.0
    %657 = vmatpush1.msra.mxu0 0.0
    %658 = vmatprep.subr.mxu0 0.0
    %659 = vmatpush1.msra.mxu0 0.0
    %660 = vmatprep.subr.mxu0 0.0
    %661 = vmatpush1.msra.mxu0 0.0
    %662 = vmatprep.subr.mxu0 0.0
    %663 = vmatpush1.msra.mxu0 0.0
    %664 = vmatprep.subr.mxu0 0.0
    %665 = vmatpush1.msra.mxu0 0.0
    %666 = vmatprep.subr.mxu0 0.0
    %667 = vmatpush1.msra.mxu0 0.0
    %668 = vmatprep.subr.mxu0 0.0
    %669 = vmatpush1.msra.mxu0 0.0
    %670 = vmatprep.subr.mxu0 0.0
    %671 = vmatpush1.msra.mxu0 0.0
    %672 = vmatprep.subr.mxu0 0.0
    %673 = vmatpush1.msra.mxu0 0.0
    %674 = vmatprep.subr.mxu0 0.0
    %675 = vmatpush1.msra.mxu0 0.0
    %676 = vmatprep.subr.mxu0 0.0
    %677 = vmatpush1.msra.mxu0 0.0
    %678 = vmatprep.subr.mxu0 0.0
    %679 = vmatpush1.msra.mxu0 0.0
    %680 = vmatprep.subr.mxu0 0.0
    %681 = vmatpush1.msra.mxu0 0.0
    %682 = vmatprep.mubr.f32.mxu0 0.0
    %683 = vmatmul.mubr.f32.gmra.mrb[0].mxu0 %v614
    %v684 = vpop.f32.mrb[0].mxu0
    %v685 = vadd.f32 0.0, %v684
    %v686 = vpop.f32.mrb[0].mxu0
    %687 = vdwg.mxu0
    %v688 = vadd.f32 %v617, %v685
    %v689 = vtanh.pop %v688
    %690 = vst [vmem:[%s616] sm:$0xff] %v689
    %s691 = scalar_lea.vmem [#allocation2], 48
    %v692 = vld [vmem:[%s691] sm:$0xff]
    %693 = vmatprep.subr.mxu0 0.0
    %694 = vmatpush1.msra.mxu0 %v226
    %695 = vmatprep.subr.mxu0 0.0
    %696 = vmatpush1.msra.mxu0 %v227
    %697 = vmatprep.subr.mxu0 0.0
    %698 = vmatpush1.msra.mxu0 %v228
    %699 = vmatprep.subr.mxu0 0.0
    %700 = vmatpush1.msra.mxu0 %v229
    %701 = vmatprep.subr.mxu0 0.0
    %702 = vmatpush1.msra.mxu0 %v230
    %703 = vmatprep.subr.mxu0 0.0
    %704 = vmatpush1.msra.mxu0 %v231
    %705 = vmatprep.subr.mxu0 0.0
    %706 = vmatpush1.msra.mxu0 %v232
    %707 = vmatprep.subr.mxu0 0.0
    %708 = vmatpush1.msra.mxu0 %v233
    %709 = vmatprep.subr.mxu0 0.0
    %710 = vmatpush1.msra.mxu0 %v234
    %711 = vmatprep.subr.mxu0 0.0
    %712 = vmatpush1.msra.mxu0 %v235
    %713 = vmatprep.subr.mxu0 0.0
    %714 = vmatpush1.msra.mxu0 %v236
    %715 = vmatprep.subr.mxu0 0.0
    %716 = vmatpush1.msra.mxu0 %v237
    %717 = vmatprep.subr.mxu0 0.0
    %718 = vmatpush1.msra.mxu0 %v238
    %719 = vmatprep.subr.mxu0 0.0
    %720 = vmatpush1.msra.mxu0 %v239
    %721 = vmatprep.subr.mxu0 0.0
    %722 = vmatpush1.msra.mxu0 %v240
    %723 = vmatprep.subr.mxu0 0.0
    %724 = vmatpush1.msra.mxu0 %v241
    %725 = vmatprep.subr.mxu0 0.0
    %726 = vmatpush1.msra.mxu0 0.0
    %727 = vmatprep.subr.mxu0 0.0
    %728 = vmatpush1.msra.mxu0 0.0
    %729 = vmatprep.subr.mxu0 0.0
    %730 = vmatpush1.msra.mxu0 0.0
    %731 = vmatprep.subr.mxu0 0.0
    %732 = vmatpush1.msra.mxu0 0.0
    %733 = vmatprep.subr.mxu0 0.0
    %734 = vmatpush1.msra.mxu0 0.0
    %735 = vmatprep.subr.mxu0 0.0
    %736 = vmatpush1.msra.mxu0 0.0
    %737 = vmatprep.subr.mxu0 0.0
    %738 = vmatpush1.msra.mxu0 0.0
    %739 = vmatprep.subr.mxu0 0.0
    %740 = vmatpush1.msra.mxu0 0.0
    %741 = vmatprep.subr.mxu0 0.0
    %742 = vmatpush1.msra.mxu0 0.0
    %743 = vmatprep.subr.mxu0 0.0
    %744 = vmatpush1.msra.mxu0 0.0
    %745 = vmatprep.subr.mxu0 0.0
    %746 = vmatpush1.msra.mxu0 0.0
    %747 = vmatprep.subr.mxu0 0.0
    %748 = vmatpush1.msra.mxu0 0.0
    %749 = vmatprep.subr.mxu0 0.0
    %750 = vmatpush1.msra.mxu0 0.0
    %751 = vmatprep.subr.mxu0 0.0
    %752 = vmatpush1.msra.mxu0 0.0
    %753 = vmatprep.subr.mxu0 0.0
    %754 = vmatpush1.msra.mxu0 0.0
    %755 = vmatprep.subr.mxu0 0.0
    %756 = vmatpush1.msra.mxu0 0.0
    %757 = vmatprep.mubr.f32.mxu0 0.0
    %758 = vmatmul.mubr.f32.gmra.mrb[0].mxu0 %v689
    %v759 = vpop.f32.mrb[0].mxu0
    %v760 = vadd.f32 0.0, %v759
    %v761 = vpop.f32.mrb[0].mxu0
    %762 = vdwg.mxu0
    %v763 = vadd.f32 %v692, %v760
    %v764 = vtanh.pop %v763
    %765 = vst [vmem:[%s691] sm:$0xff] %v764
    %s766 = scalar_lea.vmem [#allocation2], 56
    %v767 = vld [vmem:[%s766] sm:$0xff]
    %768 = vmatprep.subr.mxu0 0.0
    %769 = vmatpush1.msra.mxu0 %v226
    %770 = vmatprep.subr.mxu0 0.0
    %771 = vmatpush1.msra.mxu0 %v227
    %772 = vmatprep.subr.mxu0 0.0
    %773 = vmatpush1.msra.mxu0 %v228
    %774 = vmatprep.subr.mxu0 0.0
    %775 = vmatpush1.msra.mxu0 %v229
    %776 = vmatprep.subr.mxu0 0.0
    %777 = vmatpush1.msra.mxu0 %v230
    %778 = vmatprep.subr.mxu0 0.0
    %779 = vmatpush1.msra.mxu0 %v231
    %780 = vmatprep.subr.mxu0 0.0
    %781 = vmatpush1.msra.mxu0 %v232
    %782 = vmatprep.subr.mxu0 0.0
    %783 = vmatpush1.msra.mxu0 %v233
    %784 = vmatprep.subr.mxu0 0.0
    %785 = vmatpush1.msra.mxu0 %v234
    %786 = vmatprep.subr.mxu0 0.0
    %787 = vmatpush1.msra.mxu0 %v235
    %788 = vmatprep.subr.mxu0 0.0
    %789 = vmatpush1.msra.mxu0 %v236
    %790 = vmatprep.subr.mxu0 0.0
    %791 = vmatpush1.msra.mxu0 %v237
    %792 = vmatprep.subr.mxu0 0.0
    %793 = vmatpush1.msra.mxu0 %v238
    %794 = vmatprep.subr.mxu0 0.0
    %795 = vmatpush1.msra.mxu0 %v239
    %796 = vmatprep.subr.mxu0 0.0
    %797 = vmatpush1.msra.mxu0 %v240
    %798 = vmatprep.subr.mxu0 0.0
    %799 = vmatpush1.msra.mxu0 %v241
    %800 = vmatprep.subr.mxu0 0.0
    %801 = vmatpush1.msra.mxu0 0.0
    %802 = vmatprep.subr.mxu0 0.0
    %803 = vmatpush1.msra.mxu0 0.0
    %804 = vmatprep.subr.mxu0 0.0
    %805 = vmatpush1.msra.mxu0 0.0
    %806 = vmatprep.subr.mxu0 0.0
    %807 = vmatpush1.msra.mxu0 0.0
    %808 = vmatprep.subr.mxu0 0.0
    %809 = vmatpush1.msra.mxu0 0.0
    %810 = vmatprep.subr.mxu0 0.0
    %811 = vmatpush1.msra.mxu0 0.0
    %812 = vmatprep.subr.mxu0 0.0
    %813 = vmatpush1.msra.mxu0 0.0
    %814 = vmatprep.subr.mxu0 0.0
    %815 = vmatpush1.msra.mxu0 0.0
    %816 = vmatprep.subr.mxu0 0.0
    %817 = vmatpush1.msra.mxu0 0.0
    %818 = vmatprep.subr.mxu0 0.0
    %819 = vmatpush1.msra.mxu0 0.0
    %820 = vmatprep.subr.mxu0 0.0
    %821 = vmatpush1.msra.mxu0 0.0
    %822 = vmatprep.subr.mxu0 0.0
    %823 = vmatpush1.msra.mxu0 0.0
    %824 = vmatprep.subr.mxu0 0.0
    %825 = vmatpush1.msra.mxu0 0.0
    %826 = vmatprep.subr.mxu0 0.0
    %827 = vmatpush1.msra.mxu0 0.0
    %828 = vmatprep.subr.mxu0 0.0
    %829 = vmatpush1.msra.mxu0 0.0
    %830 = vmatprep.subr.mxu0 0.0
    %831 = vmatpush1.msra.mxu0 0.0
    %832 = vmatprep.mubr.f32.mxu0 0.0
    %833 = vmatmul.mubr.f32.gmra.mrb[0].mxu0 %v764
    %v834 = vpop.f32.mrb[0].mxu0
    %v835 = vadd.f32 0.0, %v834
    %v836 = vpop.f32.mrb[0].mxu0
    %837 = vdwg.mxu0
    %v838 = vadd.f32 %v767, %v835
    %v839 = vtanh.pop %v838
    %840 = vst [vmem:[%s766] sm:$0xff] %v839
    %841 = vst [vmem:[#allocation12] sm:$0xff] %v839
    %v842 = vld [vmem:[#allocation2] sm:$0xff]
    %v843 = vld [vmem:[#allocation2 + $0x8] sm:$0xff]
    %v844 = vld [vmem:[#allocation2 + $0x10] sm:$0xff]
    %v845 = vld [vmem:[#allocation2 + $0x18] sm:$0xff]
    %v846 = vld [vmem:[#allocation2 + $0x20] sm:$0xff]
    %v847 = vld [vmem:[#allocation2 + $0x28] sm:$0xff]
    %v848 = vld [vmem:[#allocation2 + $0x30] sm:$0xff]
    %v849 = vld [vmem:[#allocation2 + $0x38] sm:$0xff]
    %v850 = vld [vmem:[#allocation9] sm:$0xff]
    %v851 = vld [vmem:[#allocation9 + $0x8] sm:$0xff]
    %v852 = vld [vmem:[#allocation9 + $0x10] sm:$0xff]
    %v853 = vld [vmem:[#allocation9 + $0x18] sm:$0xff]
    %v854 = vld [vmem:[#allocation9 + $0x20] sm:$0xff]
    %v855 = vld [vmem:[#allocation9 + $0x28] sm:$0xff]
    %v856 = vld [vmem:[#allocation9 + $0x30] sm:$0xff]
    %v857 = vld [vmem:[#allocation9 + $0x38] sm:$0xff]
    %v858 = vld [vmem:[#allocation9 + $0x40] sm:$0xff]
    %v859 = vld [vmem:[#allocation9 + $0x48] sm:$0xff]
    %v860 = vld [vmem:[#allocation9 + $0x50] sm:$0xff]
    %v861 = vld [vmem:[#allocation9 + $0x58] sm:$0xff]
    %v862 = vld [vmem:[#allocation9 + $0x60] sm:$0xff]
    %v863 = vld [vmem:[#allocation9 + $0x68] sm:$0xff]
    %v864 = vld [vmem:[#allocation9 + $0x70] sm:$0xff]
    %v865 = vld [vmem:[#allocation9 + $0x78] sm:$0xff]
    %v866 = vld [vmem:[%s5] sm:$0x1]
    %v868 = vlaneseq
    %v869 = vshrl.u32 %v868, 7
    %v870 = vsub.s32 0, %v869
    %v871 = vrot.slane %v866, %v870
    %873 = vmatprep.subr.mxu0 0.0
    %874 = vmatpush1.msra.mxu0 %v850
    %875 = vmatprep.subr.mxu0 0.0
    %876 = vmatpush1.msra.mxu0 %v851
    %877 = vmatprep.subr.mxu0 0.0
    %878 = vmatpush1.msra.mxu0 %v852
    %879 = vmatprep.subr.mxu0 0.0
    %880 = vmatpush1.msra.mxu0 %v853
    %881 = vmatprep.subr.mxu0 0.0
    %882 = vmatpush1.msra.mxu0 %v854
    %883 = vmatprep.subr.mxu0 0.0
    %884 = vmatpush1.msra.mxu0 %v855
    %885 = vmatprep.subr.mxu0 0.0
    %886 = vmatpush1.msra.mxu0 %v856
    %887 = vmatprep.subr.mxu0 0.0
    %888 = vmatpush1.msra.mxu0 %v857
    %889 = vmatprep.subr.mxu0 0.0
    %890 = vmatpush1.msra.mxu0 %v858
    %891 = vmatprep.subr.mxu0 0.0
    %892 = vmatpush1.msra.mxu0 %v859
    %893 = vmatprep.subr.mxu0 0.0
    %894 = vmatpush1.msra.mxu0 %v860
    %895 = vmatprep.subr.mxu0 0.0
    %896 = vmatpush1.msra.mxu0 %v861
    %897 = vmatprep.subr.mxu0 0.0
    %898 = vmatpush1.msra.mxu0 %v862
    %899 = vmatprep.subr.mxu0 0.0
    %900 = vmatpush1.msra.mxu0 %v863
    %901 = vmatprep.subr.mxu0 0.0
    %902 = vmatpush1.msra.mxu0 %v864
    %903 = vmatprep.subr.mxu0 0.0
    %904 = vmatpush1.msra.mxu0 %v865
    %905 = vmatprep.subr.mxu0 0.0
    %906 = vmatpush1.msra.mxu0 0.0
    %907 = vmatprep.subr.mxu0 0.0
    %908 = vmatpush1.msra.mxu0 0.0
    %909 = vmatprep.subr.mxu0 0.0
    %910 = vmatpush1.msra.mxu0 0.0
    %911 = vmatprep.subr.mxu0 0.0
    %912 = vmatpush1.msra.mxu0 0.0
    %913 = vmatprep.subr.mxu0 0.0
    %914 = vmatpush1.msra.mxu0 0.0
    %915 = vmatprep.subr.mxu0 0.0
    %916 = vmatpush1.msra.mxu0 0.0
    %917 = vmatprep.subr.mxu0 0.0
    %918 = vmatpush1.msra.mxu0 0.0
    %919 = vmatprep.subr.mxu0 0.0
    %920 = vmatpush1.msra.mxu0 0.0
    %921 = vmatprep.subr.mxu0 0.0
    %922 = vmatpush1.msra.mxu0 0.0
    %923 = vmatprep.subr.mxu0 0.0
    %924 = vmatpush1.msra.mxu0 0.0
    %925 = vmatprep.subr.mxu0 0.0
    %926 = vmatpush1.msra.mxu0 0.0
    %927 = vmatprep.subr.mxu0 0.0
    %928 = vmatpush1.msra.mxu0 0.0
    %929 = vmatprep.subr.mxu0 0.0
    %930 = vmatpush1.msra.mxu0 0.0
    %931 = vmatprep.subr.mxu0 0.0
    %932 = vmatpush1.msra.mxu0 0.0
    %933 = vmatprep.subr.mxu0 0.0
    %934 = vmatpush1.msra.mxu0 0.0
    %935 = vmatprep.subr.mxu0 0.0
    %936 = vmatpush1.msra.mxu0 0.0
    %937 = vmatprep.mubr.f32.mxu0 0.0
    %938 = vmatmul.mubr.f32.gmra.mrb[0].mxu0 %v842
    %v939 = vpop.f32.mrb[0].mxu0
    %v940 = vadd.f32 %v871, %v939
    %v941 = vpop.f32.mrb[0].mxu0
    %942 = vmatprep.mubr.f32.mxu0 0.0
    %943 = vmatmul.mubr.f32.gmra.mrb[0].mxu0 %v843
    %v944 = vpop.f32.mrb[0].mxu0
    %v945 = vadd.f32 %v871, %v944
    %v946 = vpop.f32.mrb[0].mxu0
    %947 = vmatprep.mubr.f32.mxu0 0.0
    %948 = vmatmul.mubr.f32.gmra.mrb[0].mxu0 %v844
    %v949 = vpop.f32.mrb[0].mxu0
    %v950 = vadd.f32 %v871, %v949
    %v951 = vpop.f32.mrb[0].mxu0
    %952 = vmatprep.mubr.f32.mxu0 0.0
    %953 = vmatmul.mubr.f32.gmra.mrb[0].mxu0 %v845
    %v954 = vpop.f32.mrb[0].mxu0
    %v955 = vadd.f32 %v871, %v954
    %v956 = vpop.f32.mrb[0].mxu0
    %957 = vmatprep.mubr.f32.mxu0 0.0
    %958 = vmatmul.mubr.f32.gmra.mrb[0].mxu0 %v846
    %v959 = vpop.f32.mrb[0].mxu0
    %v960 = vadd.f32 %v871, %v959
    %v961 = vpop.f32.mrb[0].mxu0
    %962 = vmatprep.mubr.f32.mxu0 0.0
    %963 = vmatmul.mubr.f32.gmra.mrb[0].mxu0 %v847
    %v964 = vpop.f32.mrb[0].mxu0
    %v965 = vadd.f32 %v871, %v964
    %v966 = vpop.f32.mrb[0].mxu0
    %967 = vmatprep.mubr.f32.mxu0 0.0
    %968 = vmatmul.mubr.f32.gmra.mrb[0].mxu0 %v848
    %v969 = vpop.f32.mrb[0].mxu0
    %v970 = vadd.f32 %v871, %v969
    %v971 = vpop.f32.mrb[0].mxu0
    %972 = vmatprep.mubr.f32.mxu0 0.0
    %973 = vmatmul.mubr.f32.gmra.mrb[0].mxu0 %v849
    %v974 = vpop.f32.mrb[0].mxu0
    %v975 = vadd.f32 %v871, %v974
    %v976 = vpop.f32.mrb[0].mxu0
    %977 = vdwg.mxu0
    %978 = vst [vmem:[#allocation11] sm:$0xff] %v940
    %979 = vst [vmem:[#allocation11 + $0x8] sm:$0xff] %v945
    %980 = vst [vmem:[#allocation11 + $0x10] sm:$0xff] %v950
    %981 = vst [vmem:[#allocation11 + $0x18] sm:$0xff] %v955
    %982 = vst [vmem:[#allocation11 + $0x20] sm:$0xff] %v960
    %983 = vst [vmem:[#allocation11 + $0x28] sm:$0xff] %v965
    %984 = vst [vmem:[#allocation11 + $0x30] sm:$0xff] %v970
    %985 = vst [vmem:[#allocation11 + $0x38] sm:$0xff] %v975
    // Predicated region
    $region42: #{tpu_custom_call.1} parent=1 // pred_check
      _
    $region43: #{tpu_custom_call.1} parent=1 // pred_check_branch
      %987 = sbr.rel (0) target = $region45
    $region44: #{tpu_custom_call.1} parent=1 // pred_region
      %s989 = ssub.s32 1024, 1024
      %990 = vsyncadd [#allocation5], %s989
      %s991 = sshll.u32 [#allocation11], 4
      %s992 = int_to_ptr.vmem [resolvable:$true] %s991
      %997 = dma.vmem_to_hbm [thread:$0]  %s992, 1024, %s6, [#allocation5], 128, 128, 8
    $region45: #{tpu_custom_call.1} parent=1 // pred_fallthru
      _
    // Predicated region
    $region46: #{tpu_custom_call.1} parent=1 // pred_check
      _
    $region47: #{tpu_custom_call.1} parent=1 // pred_check_branch
      %999 = sbr.rel (0) target = $region49
    $region48: #{tpu_custom_call.1} parent=1 // pred_region
      %s1001 = ssub.s32 128, 128
      %1002 = vsyncadd [#allocation13], %s1001
      %s1004 = sshll.u32 [#allocation12], 4
      %s1005 = int_to_ptr.vmem [resolvable:$true] %s1004
      %1007 = dma.vmem_to_hbm [thread:$0]  %s1005, 128, %s7, [#allocation13]
    $region49: #{tpu_custom_call.1} parent=1 // pred_fallthru
      _
    // Predicated region
    $region50: #{tpu_custom_call.1} parent=1 // pred_check
      _
    $region51: #{tpu_custom_call.1} parent=1 // pred_check_branch
      %1009 = sbr.rel (0) target = $region53
    $region52: #{tpu_custom_call.1} parent=1 // pred_region
      %1010 = dma.done [#allocation5], 1024
    $region53: #{tpu_custom_call.1} parent=1 // pred_fallthru
      _
    // Predicated region
    $region54: #{tpu_custom_call.1} parent=1 // pred_check
      _
    $region55: #{tpu_custom_call.1} parent=1 // pred_check_branch
      %1012 = sbr.rel (0) target = $region57
    $region56: #{tpu_custom_call.1} parent=1 // pred_region
      %1013 = dma.done [#allocation13], 128
    $region57: #{tpu_custom_call.1} parent=1 // pred_fallthru
      _
    %1014 = vsyncpa [#allocation4], 1
    %1015 = vsyncpa [#allocation7], 1
    %1016 = vsyncpa [#allocation10], 1
    %1017 = vsyncpa [#allocation5], 1
    %1018 = vsyncpa [#allocation13], 1

</llo_original>
